<compile_context>
chip_gen: v6e
topology: v6e:2x2x1
jax: 0.10.0
libtpu: 0.0.40
codegen_flags: <defaults>
</compile_context>

<pallas_src>
import functools

import jax
import jax.numpy as jnp
from jax.experimental import pallas as pl
from jax.experimental.pallas import tpu as pltpu

LANE = 128  # one lane-dense tile width; each (padded) layer is exactly one MXU tile


def _round_up(x, m):
    return (x + m - 1) // m * m


def _generator_kernel(num_layers, x_ref, w_ref, b_ref, out_ref):
    """Fused MLP forward for one (TB, 128) activation tile.

    x_ref:   (TB, 128)          f32   activation tile (zero-padded lanes/rows)
    w_ref:   (L, 128, 128)      bf16  all layer weights, lane-padded, VMEM-resident
    b_ref:   (L, 1, 128)        f32   all layer biases, lane-padded
    out_ref: (TB, 128)          f32
    """
    h = x_ref[...]  # already f32, no redundant cast
    for layer in range(num_layers):
        w = w_ref[layer]            # (128, 128) bf16
        b = b_ref[layer]            # (1, 128) f32, broadcasts over rows
        # bf16 MXU inputs, f32 accumulation.
        h = jnp.dot(h.astype(jnp.bfloat16), w,
                    preferred_element_type=jnp.float32) + b
        if layer < num_layers - 1:
            # LeakyReLU(0.2) in f32: single vmul + vmax.
            h = jnp.maximum(h, 0.2 * h)
            # TODO(synk): nn.Dropout(p=0.2) is eval-mode identity here; a training-mode
            # mask would need pltpu.prng_seed / pltpu.prng_random_bits.
        else:
            h = jax.nn.sigmoid(h)   # f32 (EUP)
    out_ref[...] = h


def generator_forward(x, params, input_size):
    """params: list of (W (in,out) f32, b (1,out) f32) per Linear layer.

    Computes y = sigmoid(...leakyrelu(x @ W0 + b0)... @ WL + bL), matching
    PyTorch's x.view(-1, input_size) -> Sequential forward.
    """
    num_layers = len(params)
    out_size = params[-1][0].shape[1]

    x2 = x.reshape(-1, input_size).astype(jnp.float32)
    batch = x2.shape[0]

    # ---- pack + lane-pad parameters into two aligned operands -------------
    w_packed = jnp.zeros((num_layers, LANE, LANE), jnp.bfloat16)
    b_packed = jnp.zeros((num_layers, 1, LANE), jnp.float32)
    for i, (w, b) in enumerate(params):
        w_packed = w_packed.at[i, : w.shape[0], : w.shape[1]].set(
            w.astype(jnp.bfloat16))
        b_packed = b_packed.at[i, :, : b.shape[1]].set(b.astype(jnp.float32))
    # (padded weight rows/cols and bias lanes are zero, so padded activation
    #  lanes stay exactly 0 through every hidden layer; the final sigmoid's
    #  0.5 in padded lanes is sliced off below.)

    # ---- batch tiling ------------------------------------------------------
    tb = min(512, _round_up(batch, 8))       # sublane-aligned, <= ~0.25 MiB/buffer
    batch_p = _round_up(batch, tb)

    x_p = jnp.zeros((batch_p, LANE), jnp.float32)
    x_p = x_p.at[:batch, :input_size].set(x2)

    grid = (batch_p // tb,)

    cost = pl.CostEstimate(
        flops=2 * batch_p * LANE * LANE * num_layers,
        transcendentals=batch_p * LANE,      # final sigmoid
        bytes_accessed=(x_p.size * 4 + w_packed.size * 2
                        + b_packed.size * 4 + batch_p * LANE * 4),
    )

    kernel = functools.partial(_generator_kernel, num_layers)

    out_p = pl.pallas_call(
        kernel,
        out_shape=jax.ShapeDtypeStruct((batch_p, LANE), jnp.float32),
        grid=grid,
        in_specs=[
            pl.BlockSpec((tb, LANE), lambda i: (i, 0)),                   # activations: tiled
            pl.BlockSpec((num_layers, LANE, LANE), lambda i: (0, 0, 0)),  # weights: resident
            pl.BlockSpec((num_layers, 1, LANE), lambda i: (0, 0, 0)),     # biases: resident
        ],
        out_specs=pl.BlockSpec((tb, LANE), lambda i: (i, 0)),
        compiler_params=pltpu.CompilerParams(
            dimension_semantics=("parallel",)),
        cost_estimate=cost,
    )(x_p, w_packed, b_packed)

    return out_p[:batch, :out_size]


def init_generator_params(key, input_size, output_size, hidden_size):
    """Deterministic init matching the module's layer shapes (W stored (in,out))."""
    dims = [input_size] + list(hidden_size) + [output_size]
    params = []
    for i in range(len(dims) - 1):
        fan_in, fan_out = dims[i], dims[i + 1]
        key, kw, kb = jax.random.split(key, 3)
        scale = 1.0 / jnp.sqrt(jnp.float32(fan_in))
        w = jax.random.uniform(kw, (fan_in, fan_out), jnp.float32, -scale, scale)
        b = jax.random.uniform(kb, (1, fan_out), jnp.float32, -scale, scale)
        params.append((w, b))
    return params


def _reference_forward_bf16(x, params, input_size):
    """Mirrors the kernel numerics exactly (bf16 matmul inputs, f32 accumulate)."""
    h = x.reshape(-1, input_size).astype(jnp.float32)
    n = len(params)
    for i, (w, b) in enumerate(params):
        h = jnp.dot(h.astype(jnp.bfloat16), w.astype(jnp.bfloat16),
                    preferred_element_type=jnp.float32) + b
        if i < n - 1:
            h = jnp.maximum(h, 0.2 * h)
        else:
            h = jax.nn.sigmoid(h)
    return h


def _reference_forward_f32(x, params, input_size):
    """Pure-f32 reference of the PyTorch module semantics."""
    h = x.reshape(-1, input_size).astype(jnp.float32)
    n = len(params)
    for i, (w, b) in enumerate(params):
        h = h @ w + b
        if i < n - 1:
            h = jnp.where(h > 0, h, 0.2 * h)
        else:
            h = jax.nn.sigmoid(h)
    return h


if __name__ == "__main__":
    input_size = 16
    output_size = 16
    hidden_size = [32, 64]

    key = jax.random.PRNGKey(0)
    key, kx = jax.random.split(key)

    # x.view(-1, input_size): (2, 4, 16) -> (8, 16)
    x = jax.random.normal(kx, (2, 4, 16), jnp.float32)

    params = init_generator_params(key, input_size, output_size, hidden_size)

    out = generator_forward(x, params, input_size)
    out = jax.block_until_ready(out)
    assert out.shape == (8, output_size), out.shape

    # Tight check vs a reference with identical numerics (bf16 matmul, f32 acc).
    ref_bf16 = _reference_forward_bf16(x, params, input_size)
    assert jnp.allclose(out, ref_bf16, atol=1e-4, rtol=1e-4), "mismatch vs bf16 reference"

    # Loose check vs the pure-f32 PyTorch-semantics reference (bf16 rounding only).
    ref_f32 = _reference_forward_f32(x, params, input_size)
    assert jnp.allclose(out, ref_f32, atol=5e-2, rtol=5e-2), "mismatch vs f32 reference"

    print("KERNEL_OK")
</pallas_src>

<mosaic_0001>
module attributes {stable_mosaic.version = 11 : i64} {
  func.func @_generator_kernel(%arg0: i32, %arg1: memref<8x128xf32, #tpu.memory_space<vmem>>, %arg2: memref<3x128x128xbf16, #tpu.memory_space<vmem>>, %arg3: memref<3x1x128xf32, #tpu.memory_space<vmem>>, %arg4: memref<8x128xf32, #tpu.memory_space<vmem>>) attributes {dimension_semantics = [#tpu.dimension_semantics<parallel>], iteration_bounds = array<i64: 1>, scalar_prefetch = 0 : i64, scratch_operands = 0 : i64, tpu.core_type = #tpu.core_type<tc>, window_params = [{transform_indices = @transform_0, window_bounds = array<i64: 8, 128>}, {pipeline_mode = #tpu.pipeline_mode<synchronous>, transform_indices = @transform_1, window_bounds = array<i64: 3, 128, 128>}, {pipeline_mode = #tpu.pipeline_mode<synchronous>, transform_indices = @transform_2, window_bounds = array<i64: 3, 1, 128>}, {transform_indices = @transform_3, window_bounds = array<i64: 8, 128>}]} {
    %c0 = arith.constant 0 : index
    %c0_0 = arith.constant 0 : index
    %0 = vector.load %arg1[%c0, %c0_0] : memref<8x128xf32, #tpu.memory_space<vmem>>, vector<8x128xf32>
    %c0_1 = arith.constant 0 : index
    %c0_2 = arith.constant 0 : index
    %c0_3 = arith.constant 0 : index
    %1 = vector.load %arg2[%c0_1, %c0_2, %c0_3] : memref<3x128x128xbf16, #tpu.memory_space<vmem>>, vector<1x128x128xbf16>
    %2 = vector.shape_cast %1 : vector<1x128x128xbf16> to vector<128x128xbf16>
    %c0_4 = arith.constant 0 : index
    %c0_5 = arith.constant 0 : index
    %c0_6 = arith.constant 0 : index
    %3 = vector.load %arg3[%c0_4, %c0_5, %c0_6] : memref<3x1x128xf32, #tpu.memory_space<vmem>>, vector<1x1x128xf32>
    %4 = vector.shape_cast %3 : vector<1x1x128xf32> to vector<1x128xf32>
    %5 = arith.truncf %0 : vector<8x128xf32> to vector<8x128xbf16>
    %cst = arith.constant dense<0.000000e+00> : vector<8x128xf32>
    %6 = tpu.matmul %5, %2, %cst {dimension_numbers = #tpu.dot_dimension_numbers<[1], [0], [0], [1], [0, 0, 1, 1], [], []>} : vector<8x128xbf16>, vector<128x128xbf16>, vector<8x128xf32> -> vector<8x128xf32>
    %7 = vector.broadcast %4 : vector<1x128xf32> to vector<8x128xf32>
    %8 = arith.addf %6, %7 : vector<8x128xf32>
    %cst_7 = arith.constant 2.000000e-01 : f32
    %9 = vector.broadcast %cst_7 : f32 to vector<8x128xf32>
    %10 = arith.mulf %9, %8 : vector<8x128xf32>
    %11 = arith.maximumf %8, %10 : vector<8x128xf32>
    %c1 = arith.constant 1 : index
    %c0_8 = arith.constant 0 : index
    %c0_9 = arith.constant 0 : index
    %12 = vector.load %arg2[%c1, %c0_8, %c0_9] : memref<3x128x128xbf16, #tpu.memory_space<vmem>>, vector<1x128x128xbf16>
    %13 = vector.shape_cast %12 : vector<1x128x128xbf16> to vector<128x128xbf16>
    %c1_10 = arith.constant 1 : index
    %c0_11 = arith.constant 0 : index
    %c0_12 = arith.constant 0 : index
    %14 = vector.load %arg3[%c1_10, %c0_11, %c0_12] : memref<3x1x128xf32, #tpu.memory_space<vmem>>, vector<1x1x128xf32>
    %15 = vector.shape_cast %14 : vector<1x1x128xf32> to vector<1x128xf32>
    %16 = arith.truncf %11 : vector<8x128xf32> to vector<8x128xbf16>
    %cst_13 = arith.constant dense<0.000000e+00> : vector<8x128xf32>
    %17 = tpu.matmul %16, %13, %cst_13 {dimension_numbers = #tpu.dot_dimension_numbers<[1], [0], [0], [1], [0, 0, 1, 1], [], []>} : vector<8x128xbf16>, vector<128x128xbf16>, vector<8x128xf32> -> vector<8x128xf32>
    %18 = vector.broadcast %15 : vector<1x128xf32> to vector<8x128xf32>
    %19 = arith.addf %17, %18 : vector<8x128xf32>
    %cst_14 = arith.constant 2.000000e-01 : f32
    %20 = vector.broadcast %cst_14 : f32 to vector<8x128xf32>
    %21 = arith.mulf %20, %19 : vector<8x128xf32>
    %22 = arith.maximumf %19, %21 : vector<8x128xf32>
    %c2 = arith.constant 2 : index
    %c0_15 = arith.constant 0 : index
    %c0_16 = arith.constant 0 : index
    %23 = vector.load %arg2[%c2, %c0_15, %c0_16] : memref<3x128x128xbf16, #tpu.memory_space<vmem>>, vector<1x128x128xbf16>
    %24 = vector.shape_cast %23 : vector<1x128x128xbf16> to vector<128x128xbf16>
    %c2_17 = arith.constant 2 : index
    %c0_18 = arith.constant 0 : index
    %c0_19 = arith.constant 0 : index
    %25 = vector.load %arg3[%c2_17, %c0_18, %c0_19] : memref<3x1x128xf32, #tpu.memory_space<vmem>>, vector<1x1x128xf32>
    %26 = vector.shape_cast %25 : vector<1x1x128xf32> to vector<1x128xf32>
    %27 = arith.truncf %22 : vector<8x128xf32> to vector<8x128xbf16>
    %cst_20 = arith.constant dense<0.000000e+00> : vector<8x128xf32>
    %28 = tpu.matmul %27, %24, %cst_20 {dimension_numbers = #tpu.dot_dimension_numbers<[1], [0], [0], [1], [0, 0, 1, 1], [], []>} : vector<8x128xbf16>, vector<128x128xbf16>, vector<8x128xf32> -> vector<8x128xf32>
    %29 = vector.broadcast %26 : vector<1x128xf32> to vector<8x128xf32>
    %30 = arith.addf %28, %29 : vector<8x128xf32>
    %31 = arith.negf %30 : vector<8x128xf32>
    %32 = math.exp %31 : vector<8x128xf32>
    %cst_21 = arith.constant 1.000000e+00 : f32
    %33 = vector.broadcast %cst_21 : f32 to vector<8x128xf32>
    %34 = arith.addf %33, %32 : vector<8x128xf32>
    %35 = arith.divf %33, %34 : vector<8x128xf32>
    %c0_22 = arith.constant 0 : index
    %c0_23 = arith.constant 0 : index
    %36 = vector.load %arg4[%c0_22, %c0_23] : memref<8x128xf32, #tpu.memory_space<vmem>>, vector<8x128xf32>
    tpu.vector_store %arg4[%c0_22, %c0_23], %35 {strides = array<i32>} : memref<8x128xf32, #tpu.memory_space<vmem>>, vector<8x128xf32>,
    return
  }
  func.func @transform_0(%arg0: i32) -> (i32, i32) {
    %c0_i32 = arith.constant 0 : i32
    %c0_i32_0 = arith.constant 0 : i32
    return %arg0, %c0_i32 : i32, i32
  }
  func.func @transform_1(%arg0: i32) -> (i32, i32, i32) {
    %c0_i32 = arith.constant 0 : i32
    %c0_i32_0 = arith.constant 0 : i32
    %c0_i32_1 = arith.constant 0 : i32
    %c0_i32_2 = arith.constant 0 : i32
    return %c0_i32, %c0_i32_0, %c0_i32_1 : i32, i32, i32
  }
  func.func @transform_2(%arg0: i32) -> (i32, i32, i32) {
    %c0_i32 = arith.constant 0 : i32
    %c0_i32_0 = arith.constant 0 : i32
    %c0_i32_1 = arith.constant 0 : i32
    %c0_i32_2 = arith.constant 0 : i32
    return %c0_i32, %c0_i32_0, %c0_i32_1 : i32, i32, i32
  }
  func.func @transform_3(%arg0: i32) -> (i32, i32) {
    %c0_i32 = arith.constant 0 : i32
    %c0_i32_0 = arith.constant 0 : i32
    return %arg0, %c0_i32 : i32, i32
  }
}

</mosaic_0001>

<llo_original>
// kernel: tpu_custom_call.1
$region0: #{tpu_custom_call.1}
  #allocation0 [shape = 'u32[]', space=smem, size = 0x4, offset = 0x4, fixed_abs, tag = 'smem constant byte address 0x4 - core index']
  #allocation1 [shape = 'u32[144,128]{1,0:T(1,128)}', space=vmem, size = 0x12000, scoped, tag = 'internal scratch']
  %s0 = inlined_call_operand.hbm [shape: f32[8,128], index: 0, kind: input, shape index: {}]
  %s1 = inlined_call_operand.hbm [shape: bf16[3,128,128], index: 1, kind: input, shape index: {}]
  %s2 = inlined_call_operand.vmem [shape: f32[3,1,128], index: 2, kind: input, shape index: {}]
  %s3 = inlined_call_operand.hbm [shape: f32[8,128], index: 3, kind: output, shape index: {}]
  %s4 = sld [smem:[#allocation0]]
  $region30: #{tpu_custom_call.1} parent=0
    _
  %s6 = ssub.s32 1, %s4
  %s7 = scalar_select 0, %s6, %s4
  $region1: #{tpu_custom_call.1} parent=0
    #allocation2 [shape = 'u8[4096]{0}', space=vmem, size = 0x1000, scoped, tag = 'input window, operand 0, single buffered']
    #allocation3 [shape = 's32[1]{0}', space=sflag, size = 0x4, scoped, tag = 'scoped memory for tpu_custom_call.1']
    #allocation4 [shape = 's32[1]{0}', space=sflag, size = 0x4, scoped, tag = 'scoped memory for tpu_custom_call.1']
    #allocation5 [shape = 'u8[98304]{0}', space=vmem, size = 0x18000, scoped, tag = 'input window, operand 1, single buffered']
    #allocation6 [shape = 's32[1]{0}', space=sflag, size = 0x4, scoped, tag = 'scoped memory for tpu_custom_call.1']
    #allocation7 [shape = 'u8[4096]{0}', space=vmem, size = 0x1000, scoped, tag = 'output window, operand 0, single buffered']
    %8 = vsyncpa [#allocation3], 0
    %9 = vsyncpa [#allocation6], 0
    %10 = vsyncpa [#allocation4], 0
    // Predicated region
    $region2: #{tpu_custom_call.1} parent=1 // pred_check
      _
    $region3: #{tpu_custom_call.1} parent=1 // pred_check_branch
      %12 = sbr.rel (0) target = $region5
    $region4: #{tpu_custom_call.1} parent=1 // pred_region
      %s14 = ssub.s32 128, 128
      %15 = vsyncadd [#allocation3], %s14
      %s17 = sshll.u32 [#allocation2], 4
      %s18 = int_to_ptr.vmem [resolvable:$true] %s17
      %20 = dma.hbm_to_vmem [thread:$0]  %s0, 128, %s18, [#allocation3]
    $region5: #{tpu_custom_call.1} parent=1 // pred_fallthru
      _
    // Predicated region
    $region6: #{tpu_custom_call.1} parent=1 // pred_check
      _
    $region7: #{tpu_custom_call.1} parent=1 // pred_check_branch
      %22 = sbr.rel (0) target = $region9
    $region8: #{tpu_custom_call.1} parent=1 // pred_region
      %s24 = ssub.s32 3072, 3072
      %25 = vsyncadd [#allocation6], %s24
      %s26 = sshll.u32 [#allocation5], 4
      %s27 = int_to_ptr.vmem [resolvable:$true] %s26
      %32 = dma.hbm_to_vmem [thread:$0]  %s1, 3072, %s27, [#allocation6], 64, 64, 4
    $region9: #{tpu_custom_call.1} parent=1 // pred_fallthru
      _
    // Predicated region
    $region10: #{tpu_custom_call.1} parent=1 // pred_check
      _
    $region11: #{tpu_custom_call.1} parent=1 // pred_check_branch
      %34 = sbr.rel (0) target = $region13
    $region12: #{tpu_custom_call.1} parent=1 // pred_region
      _
    $region13: #{tpu_custom_call.1} parent=1 // pred_fallthru
      _
    // Predicated region
    $region14: #{tpu_custom_call.1} parent=1 // pred_check
      _
    $region15: #{tpu_custom_call.1} parent=1 // pred_check_branch
      %36 = sbr.rel (0) target = $region17
    $region16: #{tpu_custom_call.1} parent=1 // pred_region
      %37 = dma.done [#allocation3], 128
    $region17: #{tpu_custom_call.1} parent=1 // pred_fallthru
      _
    // Predicated region
    $region18: #{tpu_custom_call.1} parent=1 // pred_check
      _
    $region19: #{tpu_custom_call.1} parent=1 // pred_check_branch
      %39 = sbr.rel (0) target = $region21
    $region20: #{tpu_custom_call.1} parent=1 // pred_region
      %40 = dma.done [#allocation6], 3072
    $region21: #{tpu_custom_call.1} parent=1 // pred_fallthru
      _
    %v42 = vld [vmem:[#allocation2] sm:$0xff]
    %v43 = vld [vmem:[#allocation5] sm:$0xf]
    %v44 = vld [vmem:[#allocation5 + $0x4] sm:$0xf]
    %v45 = vld [vmem:[#allocation5 + $0x8] sm:$0xf]
    %v46 = vld [vmem:[#allocation5 + $0xc] sm:$0xf]
    %v47 = vld [vmem:[#allocation5 + $0x10] sm:$0xf]
    %v48 = vld [vmem:[#allocation5 + $0x14] sm:$0xf]
    %v49 = vld [vmem:[#allocation5 + $0x18] sm:$0xf]
    %v50 = vld [vmem:[#allocation5 + $0x1c] sm:$0xf]
    %v51 = vld [vmem:[#allocation5 + $0x20] sm:$0xf]
    %v52 = vld [vmem:[#allocation5 + $0x24] sm:$0xf]
    %v53 = vld [vmem:[#allocation5 + $0x28] sm:$0xf]
    %v54 = vld [vmem:[#allocation5 + $0x2c] sm:$0xf]
    %v55 = vld [vmem:[#allocation5 + $0x30] sm:$0xf]
    %v56 = vld [vmem:[#allocation5 + $0x34] sm:$0xf]
    %v57 = vld [vmem:[#allocation5 + $0x38] sm:$0xf]
    %v58 = vld [vmem:[#allocation5 + $0x3c] sm:$0xf]
    %v59 = vld [vmem:[%s2] sm:$0x1]
    %v60 = vpack.c.bf16 %v42, %v42
    %v62 = vlaneseq
    %v63 = vshrl.u32 %v62, 7
    %v64 = vsub.s32 0, %v63
    %v65 = vrot.slane %v59, %v64
    %v83 = vunpack.c.l.b16 %v43
    %v84 = vunpack.c.l.b16 %v44
    %v85 = vunpack.c.l.b16 %v45
    %v86 = vunpack.c.l.b16 %v46
    %v87 = vunpack.c.l.b16 %v47
    %v88 = vunpack.c.l.b16 %v48
    %v89 = vunpack.c.l.b16 %v49
    %v90 = vunpack.c.l.b16 %v50
    %v91 = vunpack.c.l.b16 %v51
    %v92 = vunpack.c.l.b16 %v52
    %v93 = vunpack.c.l.b16 %v53
    %v94 = vunpack.c.l.b16 %v54
    %v95 = vunpack.c.l.b16 %v55
    %v96 = vunpack.c.l.b16 %v56
    %v97 = vunpack.c.l.b16 %v57
    %v98 = vunpack.c.l.b16 %v58
    %v99 = vpack.c.b16 %v84, %v83
    %v100 = vpack.c.b16 %v86, %v85
    %v101 = vpack.c.b16 %v88, %v87
    %v102 = vpack.c.b16 %v90, %v89
    %v103 = vpack.c.b16 %v92, %v91
    %v104 = vpack.c.b16 %v94, %v93
    %v105 = vpack.c.b16 %v96, %v95
    %v106 = vpack.c.b16 %v98, %v97
    %115 = vmatprep.subr.bf16.mxu0 0
    %116 = vmatpush1.bf16.msra.mxu0 %v106
    %117 = vmatprep.subr.bf16.mxu0 0
    %118 = vmatpush1.bf16.msra.mxu0 %v105
    %119 = vmatprep.subr.bf16.mxu0 0
    %120 = vmatpush1.bf16.msra.mxu0 %v104
    %121 = vmatprep.subr.bf16.mxu0 0
    %122 = vmatpush1.bf16.msra.mxu0 %v103
    %123 = vmatprep.subr.bf16.mxu0 0
    %124 = vmatpush1.bf16.msra.mxu0 %v102
    %125 = vmatprep.subr.bf16.mxu0 0
    %126 = vmatpush1.bf16.msra.mxu0 %v101
    %127 = vmatprep.subr.bf16.mxu0 0
    %128 = vmatpush1.bf16.msra.mxu0 %v100
    %129 = vmatprep.subr.bf16.mxu0 0
    %130 = vmatpush1.bf16.msra.mxu0 %v99
    %131 = vmatprep.subr.bf16.mxu0 0
    %132 = vmatpush2.bf16.msra.mxu0 0
    %133 = vmatprep.subr.bf16.mxu0 0
    %134 = vmatpush2.bf16.msra.mxu0 0
    %135 = vmatprep.subr.bf16.mxu0 0
    %136 = vmatpush2.bf16.msra.mxu0 0
    %137 = vmatprep.subr.bf16.mxu0 0
    %138 = vmatpush2.bf16.msra.mxu0 0
    %139 = vmatprep.subr.bf16.mxu0 0
    %140 = vmatpush2.bf16.msra.mxu0 0
    %141 = vmatprep.subr.bf16.mxu0 0
    %142 = vmatpush2.bf16.msra.mxu0 0
    %143 = vmatprep.subr.bf16.mxu0 0
    %144 = vmatpush2.bf16.msra.mxu0 0
    %145 = vmatprep.subr.bf16.mxu0 0
    %146 = vmatpush2.bf16.msra.mxu0 0
    %147 = vmatprep.mubr.bf16.mxu0 0
    %148 = vmatmul.mubr.bf16.gmra.mxu0 %v60
    %v149 = vpop.f32.mrf.mxu0
    %v150 = vadd.f32 %v65, %v149
    %v151 = vpop.f32.mrf.mxu0
    %v152 = vpop.f32.mrf.mxu0
    %v153 = vpop.f32.mrf.mxu0
    %154 = vdwg.mxu0
    %v155 = vmul.f32 %v150, 0.2
    %v156 = vmax.f32 %v150, %v155
    %s157 = scalar_lea.vmem [#allocation5], 64
    %v158 = vld [vmem:[%s157] sm:$0xf]
    %v159 = vld [vmem:[%s157 + $0x4] sm:$0xf]
    %v160 = vld [vmem:[%s157 + $0x8] sm:$0xf]
    %v161 = vld [vmem:[%s157 + $0xc] sm:$0xf]
    %v162 = vld [vmem:[%s157 + $0x10] sm:$0xf]
    %v163 = vld [vmem:[%s157 + $0x14] sm:$0xf]
    %v164 = vld [vmem:[%s157 + $0x18] sm:$0xf]
    %v165 = vld [vmem:[%s157 + $0x1c] sm:$0xf]
    %v166 = vld [vmem:[%s157 + $0x20] sm:$0xf]
    %v167 = vld [vmem:[%s157 + $0x24] sm:$0xf]
    %v168 = vld [vmem:[%s157 + $0x28] sm:$0xf]
    %v169 = vld [vmem:[%s157 + $0x2c] sm:$0xf]
    %v170 = vld [vmem:[%s157 + $0x30] sm:$0xf]
    %v171 = vld [vmem:[%s157 + $0x34] sm:$0xf]
    %v172 = vld [vmem:[%s157 + $0x38] sm:$0xf]
    %v173 = vld [vmem:[%s157 + $0x3c] sm:$0xf]
    %s174 = scalar_lea.vmem %s2, 1
    %v175 = vld [vmem:[%s174] sm:$0x1]
    %v176 = vpack.c.bf16 %v156, %v156
    %v178 = vlaneseq
    %v179 = vshrl.u32 %v178, 7
    %v180 = vsub.s32 0, %v179
    %v181 = vrot.slane %v175, %v180
    %v199 = vunpack.c.l.b16 %v158
    %v200 = vunpack.c.l.b16 %v159
    %v201 = vunpack.c.l.b16 %v160
    %v202 = vunpack.c.l.b16 %v161
    %v203 = vunpack.c.l.b16 %v162
    %v204 = vunpack.c.l.b16 %v163
    %v205 = vunpack.c.l.b16 %v164
    %v206 = vunpack.c.l.b16 %v165
    %v207 = vunpack.c.l.b16 %v166
    %v208 = vunpack.c.l.b16 %v167
    %v209 = vunpack.c.l.b16 %v168
    %v210 = vunpack.c.l.b16 %v169
    %v211 = vunpack.c.l.b16 %v170
    %v212 = vunpack.c.l.b16 %v171
    %v213 = vunpack.c.l.b16 %v172
    %v214 = vunpack.c.l.b16 %v173
    %v215 = vpack.c.b16 %v200, %v199
    %v216 = vpack.c.b16 %v202, %v201
    %v217 = vpack.c.b16 %v204, %v203
    %v218 = vpack.c.b16 %v206, %v205
    %v219 = vpack.c.b16 %v208, %v207
    %v220 = vpack.c.b16 %v210, %v209
    %v221 = vpack.c.b16 %v212, %v211
    %v222 = vpack.c.b16 %v214, %v213
    %231 = vmatprep.subr.bf16.mxu0 0
    %232 = vmatpush1.bf16.msra.mxu0 %v222
    %233 = vmatprep.subr.bf16.mxu0 0
    %234 = vmatpush1.bf16.msra.mxu0 %v221
    %235 = vmatprep.subr.bf16.mxu0 0
    %236 = vmatpush1.bf16.msra.mxu0 %v220
    %237 = vmatprep.subr.bf16.mxu0 0
    %238 = vmatpush1.bf16.msra.mxu0 %v219
    %239 = vmatprep.subr.bf16.mxu0 0
    %240 = vmatpush1.bf16.msra.mxu0 %v218
    %241 = vmatprep.subr.bf16.mxu0 0
    %242 = vmatpush1.bf16.msra.mxu0 %v217
    %243 = vmatprep.subr.bf16.mxu0 0
    %244 = vmatpush1.bf16.msra.mxu0 %v216
    %245 = vmatprep.subr.bf16.mxu0 0
    %246 = vmatpush1.bf16.msra.mxu0 %v215
    %247 = vmatprep.subr.bf16.mxu0 0
    %248 = vmatpush2.bf16.msra.mxu0 0
    %249 = vmatprep.subr.bf16.mxu0 0
    %250 = vmatpush2.bf16.msra.mxu0 0
    %251 = vmatprep.subr.bf16.mxu0 0
    %252 = vmatpush2.bf16.msra.mxu0 0
    %253 = vmatprep.subr.bf16.mxu0 0
    %254 = vmatpush2.bf16.msra.mxu0 0
    %255 = vmatprep.subr.bf16.mxu0 0
    %256 = vmatpush2.bf16.msra.mxu0 0
    %257 = vmatprep.subr.bf16.mxu0 0
    %258 = vmatpush2.bf16.msra.mxu0 0
    %259 = vmatprep.subr.bf16.mxu0 0
    %260 = vmatpush2.bf16.msra.mxu0 0
    %261 = vmatprep.subr.bf16.mxu0 0
    %262 = vmatpush2.bf16.msra.mxu0 0
    %263 = vmatprep.mubr.bf16.mxu0 0
    %264 = vmatmul.mubr.bf16.gmra.mxu0 %v176
    %v265 = vpop.f32.mrf.mxu0
    %v266 = vadd.f32 %v181, %v265
    %v267 = vpop.f32.mrf.mxu0
    %v268 = vpop.f32.mrf.mxu0
    %v269 = vpop.f32.mrf.mxu0
    %270 = vdwg.mxu0
    %v271 = vmul.f32 %v266, 0.2
    %v272 = vmax.f32 %v266, %v271
    %s273 = scalar_lea.vmem [#allocation5], 128
    %v274 = vld [vmem:[%s273] sm:$0xf]
    %v275 = vld [vmem:[%s273 + $0x4] sm:$0xf]
    %v276 = vld [vmem:[%s273 + $0x8] sm:$0xf]
    %v277 = vld [vmem:[%s273 + $0xc] sm:$0xf]
    %v278 = vld [vmem:[%s273 + $0x10] sm:$0xf]
    %v279 = vld [vmem:[%s273 + $0x14] sm:$0xf]
    %v280 = vld [vmem:[%s273 + $0x18] sm:$0xf]
    %v281 = vld [vmem:[%s273 + $0x1c] sm:$0xf]
    %v282 = vld [vmem:[%s273 + $0x20] sm:$0xf]
    %v283 = vld [vmem:[%s273 + $0x24] sm:$0xf]
    %v284 = vld [vmem:[%s273 + $0x28] sm:$0xf]
    %v285 = vld [vmem:[%s273 + $0x2c] sm:$0xf]
    %v286 = vld [vmem:[%s273 + $0x30] sm:$0xf]
    %v287 = vld [vmem:[%s273 + $0x34] sm:$0xf]
    %v288 = vld [vmem:[%s273 + $0x38] sm:$0xf]
    %v289 = vld [vmem:[%s273 + $0x3c] sm:$0xf]
    %s290 = scalar_lea.vmem %s2, 2
    %v291 = vld [vmem:[%s290] sm:$0x1]
    %v292 = vpack.c.bf16 %v272, %v272
    %v294 = vlaneseq
    %v295 = vshrl.u32 %v294, 7
    %v296 = vsub.s32 0, %v295
    %v297 = vrot.slane %v291, %v296
    %v315 = vunpack.c.l.b16 %v274
    %v316 = vunpack.c.l.b16 %v275
    %v317 = vunpack.c.l.b16 %v276
    %v318 = vunpack.c.l.b16 %v277
    %v319 = vunpack.c.l.b16 %v278
    %v320 = vunpack.c.l.b16 %v279
    %v321 = vunpack.c.l.b16 %v280
    %v322 = vunpack.c.l.b16 %v281
    %v323 = vunpack.c.l.b16 %v282
    %v324 = vunpack.c.l.b16 %v283
    %v325 = vunpack.c.l.b16 %v284
    %v326 = vunpack.c.l.b16 %v285
    %v327 = vunpack.c.l.b16 %v286
    %v328 = vunpack.c.l.b16 %v287
    %v329 = vunpack.c.l.b16 %v288
    %v330 = vunpack.c.l.b16 %v289
    %v331 = vpack.c.b16 %v316, %v315
    %v332 = vpack.c.b16 %v318, %v317
    %v333 = vpack.c.b16 %v320, %v319
    %v334 = vpack.c.b16 %v322, %v321
    %v335 = vpack.c.b16 %v324, %v323
    %v336 = vpack.c.b16 %v326, %v325
    %v337 = vpack.c.b16 %v328, %v327
    %v338 = vpack.c.b16 %v330, %v329
    %347 = vmatprep.subr.bf16.mxu0 0
    %348 = vmatpush1.bf16.msra.mxu0 %v338
    %349 = vmatprep.subr.bf16.mxu0 0
    %350 = vmatpush1.bf16.msra.mxu0 %v337
    %351 = vmatprep.subr.bf16.mxu0 0
    %352 = vmatpush1.bf16.msra.mxu0 %v336
    %353 = vmatprep.subr.bf16.mxu0 0
    %354 = vmatpush1.bf16.msra.mxu0 %v335
    %355 = vmatprep.subr.bf16.mxu0 0
    %356 = vmatpush1.bf16.msra.mxu0 %v334
    %357 = vmatprep.subr.bf16.mxu0 0
    %358 = vmatpush1.bf16.msra.mxu0 %v333
    %359 = vmatprep.subr.bf16.mxu0 0
    %360 = vmatpush1.bf16.msra.mxu0 %v332
    %361 = vmatprep.subr.bf16.mxu0 0
    %362 = vmatpush1.bf16.msra.mxu0 %v331
    %363 = vmatprep.subr.bf16.mxu0 0
    %364 = vmatpush2.bf16.msra.mxu0 0
    %365 = vmatprep.subr.bf16.mxu0 0
    %366 = vmatpush2.bf16.msra.mxu0 0
    %367 = vmatprep.subr.bf16.mxu0 0
    %368 = vmatpush2.bf16.msra.mxu0 0
    %369 = vmatprep.subr.bf16.mxu0 0
    %370 = vmatpush2.bf16.msra.mxu0 0
    %371 = vmatprep.subr.bf16.mxu0 0
    %372 = vmatpush2.bf16.msra.mxu0 0
    %373 = vmatprep.subr.bf16.mxu0 0
    %374 = vmatpush2.bf16.msra.mxu0 0
    %375 = vmatprep.subr.bf16.mxu0 0
    %376 = vmatpush2.bf16.msra.mxu0 0
    %377 = vmatprep.subr.bf16.mxu0 0
    %378 = vmatpush2.bf16.msra.mxu0 0
    %379 = vmatprep.mubr.bf16.mxu0 0
    %380 = vmatmul.mubr.bf16.gmra.mxu0 %v292
    %v381 = vpop.f32.mrf.mxu0
    %v382 = vadd.f32 %v297, %v381
    %v383 = vpop.f32.mrf.mxu0
    %v384 = vpop.f32.mrf.mxu0
    %v385 = vpop.f32.mrf.mxu0
    %386 = vdwg.mxu0
    %v387 = vxor.u32 %v382, 2147483648
    %v388 = vmul.f32 %v387, 1.442695
    %v389 = vpow.pop %v388
    %v390 = vadd.f32 %v389, 1.0
    %v391 = vrcp.pop %v390
    %v392 = vmul.f32 1.0, %v391
    %393 = vst [vmem:[#allocation7] sm:$0xff] %v392
    // Predicated region
    $region22: #{tpu_custom_call.1} parent=1 // pred_check
      _
    $region23: #{tpu_custom_call.1} parent=1 // pred_check_branch
      %395 = sbr.rel (0) target = $region25
    $region24: #{tpu_custom_call.1} parent=1 // pred_region
      %s397 = ssub.s32 128, 128
      %398 = vsyncadd [#allocation4], %s397
      %s400 = sshll.u32 [#allocation7], 4
      %s401 = int_to_ptr.vmem [resolvable:$true] %s400
      %403 = dma.vmem_to_hbm [thread:$0]  %s401, 128, %s3, [#allocation4]
    $region25: #{tpu_custom_call.1} parent=1 // pred_fallthru
      _
    // Predicated region
    $region26: #{tpu_custom_call.1} parent=1 // pred_check
      _
    $region27: #{tpu_custom_call.1} parent=1 // pred_check_branch
      %405 = sbr.rel (0) target = $region29
    $region28: #{tpu_custom_call.1} parent=1 // pred_region
      %406 = dma.done [#allocation4], 128
    $region29: #{tpu_custom_call.1} parent=1 // pred_fallthru
      _
    %407 = vsyncpa [#allocation3], 1
    %408 = vsyncpa [#allocation6], 1
    %409 = vsyncpa [#allocation4], 1

</llo_original>
